<compile_context>
chip_gen: v7x
topology: tpu7x:2x2x1
jax: 0.10.0
libtpu: 0.0.40
codegen_flags: <defaults>
</compile_context>

<pallas_src>
import math

import jax
import jax.numpy as jnp
from jax.experimental import pallas as pl
from jax.experimental.pallas import tpu as pltpu


def _finish(adj_block, agg, b_ref, out_ref):
    """denom, reciprocal scale, bias, relu, cast, store."""
    # Row-sum on the XLU (has slack while the MXU is busy).
    denom = jnp.sum(adj_block.astype(jnp.float32), axis=-1, keepdims=True) + 1.0
    # Reciprocal on the EUP instead of a VPU divide.
    out = agg * pl.reciprocal(denom, approx=True)
    out = out + b_ref[...]                      # (1, Fp) broadcast
    out_ref[...] = jnp.maximum(out, 0.0).astype(out_ref.dtype)


def _adj_first_kernel(text_ref, adj_ref, w_ref, b_ref, out_ref):
    # Blocks: text (Bb, N, F_in), adj (Bb, TM, N), w (F_in, Fp), b (1, Fp),
    #         out (Bb, TM, Fp).  Used when F_in < Fp (fewer FLOPs this way).
    a = adj_ref[...]
    t = text_ref[...]
    bb, tm, _ = a.shape
    f_in = t.shape[-1]
    fp = w_ref.shape[-1]

    # (adj @ text): batched MXU matmul with f32 accumulation, native dtypes in.
    tmp = jnp.einsum("bmk,bkf->bmf", a, t,
                     preferred_element_type=jnp.float32)            # (Bb,TM,F_in)
    # Fold (Bb, TM) into one M dimension -> single big 2-D matmul.
    agg = jnp.dot(tmp.reshape(bb * tm, f_in), w_ref[...],
                  preferred_element_type=jnp.float32).reshape(bb, tm, fp)
    _finish(a, agg, b_ref, out_ref)


def _hidden_first_kernel(text_ref, adj_ref, w_ref, b_ref, out_ref, hid_ref):
    # Used when F_in >= Fp:  hidden = text @ W is computed once per batch tile
    # (row axis is sequential / "arbitrary") and cached in VMEM scratch.
    bb, tm, n = adj_ref.shape
    f_in = text_ref.shape[-1]
    fp = w_ref.shape[-1]

    @pl.when(pl.program_id(1) == 0)
    def _():
        t2 = text_ref[...].reshape(bb * n, f_in)                    # fold batches
        hid_ref[...] = jnp.dot(t2, w_ref[...],
                               preferred_element_type=jnp.float32)  # (Bb*N, Fp)

    hidden = hid_ref[...].reshape(bb, n, fp)
    a = adj_ref[...]
    agg = jnp.einsum("bmk,bkf->bmf", a, hidden,
                     preferred_element_type=jnp.float32)            # (Bb,TM,Fp)
    _finish(a, agg, b_ref, out_ref)


def _divisors_desc(n):
    return [d for d in range(n, 0, -1) if n % d == 0]


def _choose_tiles(B, N, F_in, Fp, in_itemsize, out_itemsize,
                  budget_bytes=12 * 1024 * 1024):
    """Pick (batch tile Bb, row tile TM) that divide B / N and fit VMEM budget."""
    # Row tile: largest divisor of N that is a multiple of 8 (sublane), or N
    # itself, whose double-buffered (TM, N) adj slab fits half the budget.
    tm = N
    for d in _divisors_desc(N):
        if (d % 8 == 0 or d == N) and 2 * d * N * in_itemsize <= budget_bytes // 2:
            tm = d
            break
    # Batch tile: largest divisor of B keeping the whole working set under
    # budget (2x double buffering for pipelined blocks + f32 hidden scratch).
    bb = 1
    for d in _divisors_desc(B):
        use = (2 * d * (N * F_in * in_itemsize        # text block
                        + tm * N * in_itemsize        # adj block
                        + tm * Fp * out_itemsize)     # out block
               + d * N * Fp * 4)                      # hidden scratch (f32)
        if use <= budget_bytes:
            bb = d
            break
    return bb, tm


@jax.jit
def graph_convolution(text, adj, weight, bias):
    B, N, F_in = text.shape
    F_out = weight.shape[1]

    # Lane-dense output: pad the feature dim to a multiple of 128 so stores
    # are unmasked full-lane vst; slice the padding off afterwards.
    Fp = ((F_out + 127) // 128) * 128
    if Fp != F_out:
        weight_p = jnp.pad(weight, ((0, 0), (0, Fp - F_out)))
        bias_p = jnp.pad(bias, (0, Fp - F_out))
    else:
        weight_p, bias_p = weight, bias
    bias2d = bias_p.reshape(1, Fp).astype(jnp.float32)

    in_itemsize = max(text.dtype.itemsize, adj.dtype.itemsize)
    out_itemsize = text.dtype.itemsize
    Bb, TM = _choose_tiles(B, N, F_in, Fp, in_itemsize, out_itemsize)
    grid = (B // Bb, N // TM)

    # Cheaper matmul association, chosen statically.
    adj_first = F_in < Fp
    if adj_first:
        kernel = _adj_first_kernel
        scratch = []
        semantics = ("parallel", "parallel")    # both axes splittable on v7x
    else:
        kernel = _hidden_first_kernel
        scratch = [pltpu.VMEM((Bb * N, Fp), jnp.float32)]
        semantics = ("parallel", "arbitrary")   # row axis reuses hidden scratch

    vmem_est = (2 * Bb * (N * F_in * in_itemsize + TM * N * in_itemsize
                          + TM * Fp * out_itemsize)
                + Bb * N * Fp * 4 + F_in * Fp * 4 + Fp * 4)
    vmem_limit = int(min(48 * 1024 * 1024, max(32 * 1024 * 1024, 2 * vmem_est)))

    out_p = pl.pallas_call(
        kernel,
        out_shape=jax.ShapeDtypeStruct((B, N, Fp), text.dtype),
        grid_spec=pltpu.PrefetchScalarGridSpec(
            num_scalar_prefetch=0,
            grid=grid,
            in_specs=[
                pl.BlockSpec((Bb, N, F_in), lambda bi, ri: (bi, 0, 0)),
                pl.BlockSpec((Bb, TM, N), lambda bi, ri: (bi, ri, 0)),
                pl.BlockSpec((F_in, Fp), lambda bi, ri: (0, 0)),
                pl.BlockSpec((1, Fp), lambda bi, ri: (0, 0)),
            ],
            out_specs=pl.BlockSpec((Bb, TM, Fp), lambda bi, ri: (bi, ri, 0)),
            scratch_shapes=scratch,
        ),
        compiler_params=pltpu.CompilerParams(
            dimension_semantics=semantics,
            vmem_limit_bytes=vmem_limit,
        ),
    )(text, adj, weight_p, bias2d)

    return out_p[..., :F_out] if Fp != F_out else out_p


def init_params(key, in_features, out_features):
    """Deterministic init mimicking the PyTorch module's reset_parameters()."""
    kw, kb = jax.random.split(key)
    # kaiming_uniform_(weight, a=sqrt(5)) on a (in, out) matrix: torch's
    # _calculate_fan_in_and_fan_out gives fan_in = size(1) = out_features.
    fan_in_w = out_features
    gain = math.sqrt(2.0 / (1.0 + 5.0))
    bound_w = gain * math.sqrt(3.0 / fan_in_w)
    weight = jax.random.uniform(
        kw, (in_features, out_features), jnp.float32, -bound_w, bound_w)
    bound_b = 1.0 / math.sqrt(fan_in_w)
    bias = jax.random.uniform(kb, (out_features,), jnp.float32, -bound_b, bound_b)
    return weight, bias


def _reference(text, adj, weight, bias):
    hidden = jnp.matmul(text.astype(jnp.float32), weight.astype(jnp.float32))
    denom = jnp.sum(adj, axis=2, keepdims=True) + 1.0
    out = jnp.matmul(adj.astype(jnp.float32), hidden) / denom
    out = out + bias.astype(jnp.float32)
    return jnp.maximum(out, 0.0).astype(text.dtype)


if __name__ == "__main__":
    key = jax.random.PRNGKey(0)

    def run_case(case_key, B, N, F_in, F_out):
        k_text, k_adj, k_param = jax.random.split(case_key, 3)
        text = jax.random.normal(k_text, (B, N, F_in), dtype=jnp.float32)
        a_raw = jax.random.uniform(k_adj, (B, N, N), dtype=jnp.float32)
        adj = (a_raw > 0.5).astype(jnp.float32) + jnp.eye(N, dtype=jnp.float32)[None]
        weight, bias = init_params(k_param, F_in, F_out)

        out = jax.block_until_ready(graph_convolution(text, adj, weight, bias))
        ref = _reference(text, adj, weight, bias)
        assert out.shape == (B, N, F_out)
        # Tolerance accounts for the EUP approximate reciprocal and the
        # alternative (but mathematically identical) matmul association.
        assert jnp.allclose(out, ref, atol=5e-3, rtol=5e-3), (
            f"mismatch vs reference for shape {(B, N, F_in, F_out)}")

    k1, k2 = jax.random.split(key)
    # Exercises the (adj @ text) @ W path (F_in < padded F_out).
    run_case(k1, B=2, N=8, F_in=32, F_out=32)
    # Exercises the adj @ (text @ W) path with the VMEM hidden scratch.
    run_case(k2, B=2, N=8, F_in=256, F_out=32)

    print("KERNEL_OK")
</pallas_src>

<mosaic_0001>
module attributes {stable_mosaic.version = 11 : i64} {
  func.func @_adj_first_kernel(%arg0: i32, %arg1: i32, %arg2: memref<2x8x32xf32, #tpu.memory_space<vmem>>, %arg3: memref<2x8x8xf32, #tpu.memory_space<vmem>>, %arg4: memref<32x128xf32, #tpu.memory_space<vmem>>, %arg5: memref<1x128xf32, #tpu.memory_space<vmem>>, %arg6: memref<2x8x128xf32, #tpu.memory_space<vmem>>) attributes {dimension_semantics = [#tpu.dimension_semantics<parallel>, #tpu.dimension_semantics<parallel>], iteration_bounds = array<i64: 1, 1>, scalar_prefetch = 0 : i64, scratch_operands = 0 : i64, tpu.core_type = #tpu.core_type<tc>, window_params = [{transform_indices = @transform_0, window_bounds = array<i64: 2, 8, 32>}, {transform_indices = @transform_1, window_bounds = array<i64: 2, 8, 8>}, {pipeline_mode = #tpu.pipeline_mode<synchronous>, transform_indices = @transform_2, window_bounds = array<i64: 32, 128>}, {pipeline_mode = #tpu.pipeline_mode<synchronous>, transform_indices = @transform_3, window_bounds = array<i64: 1, 128>}, {transform_indices = @transform_4, window_bounds = array<i64: 2, 8, 128>}]} {
    %c0 = arith.constant 0 : index
    %c0_0 = arith.constant 0 : index
    %c0_1 = arith.constant 0 : index
    %0 = vector.load %arg3[%c0, %c0_0, %c0_1] : memref<2x8x8xf32, #tpu.memory_space<vmem>>, vector<2x8x8xf32>
    %c0_2 = arith.constant 0 : index
    %c0_3 = arith.constant 0 : index
    %c0_4 = arith.constant 0 : index
    %1 = vector.load %arg2[%c0_2, %c0_3, %c0_4] : memref<2x8x32xf32, #tpu.memory_space<vmem>>, vector<2x8x32xf32>
    "tpu.trace_start"() <{level = 10 : i32, message = "bmk,bkf->bmf"}> : () -> ()
    %cst = arith.constant dense<0.000000e+00> : vector<2x8x32xf32>
    %2 = tpu.matmul %0, %1, %cst {dimension_numbers = #tpu.dot_dimension_numbers<[2], [1], [1], [2], [0, 0, 0, 1, 1, 2], [0], [0]>} : vector<2x8x8xf32>, vector<2x8x32xf32>, vector<2x8x32xf32> -> vector<2x8x32xf32>
    "tpu.trace_stop"() : () -> ()
    %3 = vector.shape_cast %2 : vector<2x8x32xf32> to vector<16x32xf32>
    %c0_5 = arith.constant 0 : index
    %c0_6 = arith.constant 0 : index
    %4 = vector.load %arg4[%c0_5, %c0_6] : memref<32x128xf32, #tpu.memory_space<vmem>>, vector<32x128xf32>
    %cst_7 = arith.constant dense<0.000000e+00> : vector<16x128xf32>
    %5 = tpu.matmul %3, %4, %cst_7 {dimension_numbers = #tpu.dot_dimension_numbers<[1], [0], [0], [1], [0, 0, 1, 1], [], []>} : vector<16x32xf32>, vector<32x128xf32>, vector<16x128xf32> -> vector<16x128xf32>
    %6 = vector.shape_cast %5 : vector<16x128xf32> to vector<2x8x128xf32>
    %cst_8 = arith.constant dense<0.000000e+00> : vector<2x8xf32>
    %7 = vector.multi_reduction <add>, %0, %cst_8 [2] : vector<2x8x8xf32> to vector<2x8xf32>
    %8 = vector.shape_cast %7 : vector<2x8xf32> to vector<2x8x1xf32>
    %cst_9 = arith.constant 1.000000e+00 : f32
    %9 = vector.broadcast %cst_9 : f32 to vector<2x8x1xf32>
    %10 = arith.addf %8, %9 : vector<2x8x1xf32>
    %11 = tpu.reciprocal %10 {approx = true} : vector<2x8x1xf32> -> vector<2x8x1xf32>
    %12 = vector.broadcast %11 : vector<2x8x1xf32> to vector<2x8x128xf32>
    %13 = arith.mulf %6, %12 : vector<2x8x128xf32>
    %c0_10 = arith.constant 0 : index
    %c0_11 = arith.constant 0 : index
    %14 = vector.load %arg5[%c0_10, %c0_11] : memref<1x128xf32, #tpu.memory_space<vmem>>, vector<1x128xf32>
    %15 = vector.shape_cast %14 : vector<1x128xf32> to vector<1x1x128xf32>
    %16 = vector.broadcast %15 : vector<1x1x128xf32> to vector<2x8x128xf32>
    %17 = arith.addf %13, %16 : vector<2x8x128xf32>
    %cst_12 = arith.constant 0.000000e+00 : f32
    %18 = vector.broadcast %cst_12 : f32 to vector<2x8x128xf32>
    %19 = arith.maximumf %17, %18 : vector<2x8x128xf32>
    %c0_13 = arith.constant 0 : index
    %c0_14 = arith.constant 0 : index
    %c0_15 = arith.constant 0 : index
    %20 = vector.load %arg6[%c0_13, %c0_14, %c0_15] : memref<2x8x128xf32, #tpu.memory_space<vmem>>, vector<2x8x128xf32>
    tpu.vector_store %arg6[%c0_13, %c0_14, %c0_15], %19 {strides = array<i32>} : memref<2x8x128xf32, #tpu.memory_space<vmem>>, vector<2x8x128xf32>,
    return
  }
  func.func @transform_0(%arg0: i32, %arg1: i32) -> (i32, i32, i32) {
    %c0_i32 = arith.constant 0 : i32
    %c0_i32_0 = arith.constant 0 : i32
    %c0_i32_1 = arith.constant 0 : i32
    return %arg0, %c0_i32, %c0_i32_0 : i32, i32, i32
  }
  func.func @transform_1(%arg0: i32, %arg1: i32) -> (i32, i32, i32) {
    %c0_i32 = arith.constant 0 : i32
    %c0_i32_0 = arith.constant 0 : i32
    return %arg0, %arg1, %c0_i32 : i32, i32, i32
  }
  func.func @transform_2(%arg0: i32, %arg1: i32) -> (i32, i32) {
    %c0_i32 = arith.constant 0 : i32
    %c0_i32_0 = arith.constant 0 : i32
    %c0_i32_1 = arith.constant 0 : i32
    return %c0_i32, %c0_i32_0 : i32, i32
  }
  func.func @transform_3(%arg0: i32, %arg1: i32) -> (i32, i32) {
    %c0_i32 = arith.constant 0 : i32
    %c0_i32_0 = arith.constant 0 : i32
    %c0_i32_1 = arith.constant 0 : i32
    return %c0_i32, %c0_i32_0 : i32, i32
  }
  func.func @transform_4(%arg0: i32, %arg1: i32) -> (i32, i32, i32) {
    %c0_i32 = arith.constant 0 : i32
    %c0_i32_0 = arith.constant 0 : i32
    return %arg0, %arg1, %c0_i32 : i32, i32, i32
  }
}

</mosaic_0001>

<llo_original>
// kernel: graph_convolution.1
$region0: #{graph_convolution.1}
  #allocation0 [shape = 'u32[]', space=smem, size = 0x4, offset = 0x4, fixed_abs, tag = 'smem constant byte address 0x4 - core index']
  #allocation1 [shape = 'u32[144,128]{1,0:T(1,128)}', space=vmem, size = 0x12000, scoped, tag = 'internal scratch']
  %s0 = inlined_call_operand.vmem [shape: f32[2,8,32], index: 0, kind: input, shape index: {}]
  %s1 = inlined_call_operand.vmem [shape: f32[2,8,8], index: 1, kind: input, shape index: {}]
  %s2 = inlined_call_operand.vmem [shape: f32[32,128], index: 2, kind: input, shape index: {}]
  %s3 = inlined_call_operand.vmem [shape: f32[1,128], index: 3, kind: input, shape index: {}]
  %s4 = inlined_call_operand.hbm [shape: f32[2,8,128], index: 4, kind: output, shape index: {}]
  %s5 = sld [smem:[#allocation0]]
  $region26: #{graph_convolution.1} parent=0
    _
  %s7 = ssub.s32 1, %s5
  %s8 = scalar_select 0, %s7, %s5
  $region1: #{graph_convolution.1} parent=0
    #allocation2 [shape = 'u8[8192]{0}', space=vmem, size = 0x2000, scoped, tag = 'output window, operand 0, single buffered']
    #allocation3 [shape = 's32[1]{0}', space=sflag, size = 0x4, scoped, tag = 'scoped memory for graph_convolution.1']
    %9 = vsyncpa [#allocation3], 0
    // Predicated region
    $region2: #{graph_convolution.1} parent=1 // pred_check
      _
    $region3: #{graph_convolution.1} parent=1 // pred_check_branch
      %11 = sbr.rel (0) target = $region5
    $region4: #{graph_convolution.1} parent=1 // pred_region
      _
    $region5: #{graph_convolution.1} parent=1 // pred_fallthru
      _
    // Predicated region
    $region6: #{graph_convolution.1} parent=1 // pred_check
      _
    $region7: #{graph_convolution.1} parent=1 // pred_check_branch
      %13 = sbr.rel (0) target = $region9
    $region8: #{graph_convolution.1} parent=1 // pred_region
      _
    $region9: #{graph_convolution.1} parent=1 // pred_fallthru
      _
    // Predicated region
    $region10: #{graph_convolution.1} parent=1 // pred_check
      _
    $region11: #{graph_convolution.1} parent=1 // pred_check_branch
      %15 = sbr.rel (0) target = $region13
    $region12: #{graph_convolution.1} parent=1 // pred_region
      _
    $region13: #{graph_convolution.1} parent=1 // pred_fallthru
      _
    // Predicated region
    $region14: #{graph_convolution.1} parent=1 // pred_check
      _
    $region15: #{graph_convolution.1} parent=1 // pred_check_branch
      %17 = sbr.rel (0) target = $region17
    $region16: #{graph_convolution.1} parent=1 // pred_region
      _
    $region17: #{graph_convolution.1} parent=1 // pred_fallthru
      _
    %v18 = vld [vmem:[%s1] sm:$0xff]
    %v19 = vld [vmem:[%s1 + $0x8] sm:$0xff]
    %v20 = vld [vmem:[%s0] sm:$0xff]
    %v21 = vld [vmem:[%s0 + $0x8] sm:$0xff]
    %vm22 = vcmask 64512
    %v24 = vsel %vm22, %v18, 0
    %26 = vmatprep.subr.mxu0 0.0
    %27 = vmatpush1.msra.mxu0 %v20
    %28 = vmatprep.subr.mxu0 0.0
    %29 = vmatpush1.msra.mxu0 0.0
    %30 = vmatprep.subr.mxu0 0.0
    %31 = vmatpush1.msra.mxu0 0.0
    %32 = vmatprep.subr.mxu0 0.0
    %33 = vmatpush1.msra.mxu0 0.0
    %34 = vmatprep.subr.mxu0 0.0
    %35 = vmatpush1.msra.mxu0 0.0
    %36 = vmatprep.subr.mxu0 0.0
    %37 = vmatpush1.msra.mxu0 0.0
    %38 = vmatprep.subr.mxu0 0.0
    %39 = vmatpush1.msra.mxu0 0.0
    %40 = vmatprep.subr.mxu0 0.0
    %41 = vmatpush1.msra.mxu0 0.0
    %42 = vmatprep.subr.mxu0 0.0
    %43 = vmatpush1.msra.mxu0 0.0
    %44 = vmatprep.subr.mxu0 0.0
    %45 = vmatpush1.msra.mxu0 0.0
    %46 = vmatprep.subr.mxu0 0.0
    %47 = vmatpush1.msra.mxu0 0.0
    %48 = vmatprep.subr.mxu0 0.0
    %49 = vmatpush1.msra.mxu0 0.0
    %50 = vmatprep.subr.mxu0 0.0
    %51 = vmatpush1.msra.mxu0 0.0
    %52 = vmatprep.subr.mxu0 0.0
    %53 = vmatpush1.msra.mxu0 0.0
    %54 = vmatprep.subr.mxu0 0.0
    %55 = vmatpush1.msra.mxu0 0.0
    %56 = vmatprep.subr.mxu0 0.0
    %57 = vmatpush1.msra.mxu0 0.0
    %58 = vmatprep.subr.mxu0 0.0
    %59 = vmatpush1.msra.mxu0 0.0
    %60 = vmatprep.subr.mxu0 0.0
    %61 = vmatpush1.msra.mxu0 0.0
    %62 = vmatprep.subr.mxu0 0.0
    %63 = vmatpush1.msra.mxu0 0.0
    %64 = vmatprep.subr.mxu0 0.0
    %65 = vmatpush1.msra.mxu0 0.0
    %66 = vmatprep.subr.mxu0 0.0
    %67 = vmatpush1.msra.mxu0 0.0
    %68 = vmatprep.subr.mxu0 0.0
    %69 = vmatpush1.msra.mxu0 0.0
    %70 = vmatprep.subr.mxu0 0.0
    %71 = vmatpush1.msra.mxu0 0.0
    %72 = vmatprep.subr.mxu0 0.0
    %73 = vmatpush1.msra.mxu0 0.0
    %74 = vmatprep.subr.mxu0 0.0
    %75 = vmatpush1.msra.mxu0 0.0
    %76 = vmatprep.subr.mxu0 0.0
    %77 = vmatpush1.msra.mxu0 0.0
    %78 = vmatprep.subr.mxu0 0.0
    %79 = vmatpush1.msra.mxu0 0.0
    %80 = vmatprep.subr.mxu0 0.0
    %81 = vmatpush1.msra.mxu0 0.0
    %82 = vmatprep.subr.mxu0 0.0
    %83 = vmatpush1.msra.mxu0 0.0
    %84 = vmatprep.subr.mxu0 0.0
    %85 = vmatpush1.msra.mxu0 0.0
    %86 = vmatprep.subr.mxu0 0.0
    %87 = vmatpush1.msra.mxu0 0.0
    %88 = vmatprep.subr.mxu0 0.0
    %89 = vmatpush1.msra.mxu0 0.0
    %90 = vmatprep.mubr.f32.mxu0 0.0
    %91 = vmatmul.mubr.f32.gmra.mrb[0].mxu0 %v24
    %v92 = vpop.f32.mrb[0].mxu0
    %v93 = vadd.f32 0.0, %v92
    %v94 = vpop.f32.mrb[0].mxu0
    %95 = vdwg.mxu0
    %v97 = vsel %vm22, %v19, 0
    %99 = vmatprep.subr.mxu0 0.0
    %100 = vmatpush1.msra.mxu0 %v21
    %101 = vmatprep.subr.mxu0 0.0
    %102 = vmatpush1.msra.mxu0 0.0
    %103 = vmatprep.subr.mxu0 0.0
    %104 = vmatpush1.msra.mxu0 0.0
    %105 = vmatprep.subr.mxu0 0.0
    %106 = vmatpush1.msra.mxu0 0.0
    %107 = vmatprep.subr.mxu0 0.0
    %108 = vmatpush1.msra.mxu0 0.0
    %109 = vmatprep.subr.mxu0 0.0
    %110 = vmatpush1.msra.mxu0 0.0
    %111 = vmatprep.subr.mxu0 0.0
    %112 = vmatpush1.msra.mxu0 0.0
    %113 = vmatprep.subr.mxu0 0.0
    %114 = vmatpush1.msra.mxu0 0.0
    %115 = vmatprep.subr.mxu0 0.0
    %116 = vmatpush1.msra.mxu0 0.0
    %117 = vmatprep.subr.mxu0 0.0
    %118 = vmatpush1.msra.mxu0 0.0
    %119 = vmatprep.subr.mxu0 0.0
    %120 = vmatpush1.msra.mxu0 0.0
    %121 = vmatprep.subr.mxu0 0.0
    %122 = vmatpush1.msra.mxu0 0.0
    %123 = vmatprep.subr.mxu0 0.0
    %124 = vmatpush1.msra.mxu0 0.0
    %125 = vmatprep.subr.mxu0 0.0
    %126 = vmatpush1.msra.mxu0 0.0
    %127 = vmatprep.subr.mxu0 0.0
    %128 = vmatpush1.msra.mxu0 0.0
    %129 = vmatprep.subr.mxu0 0.0
    %130 = vmatpush1.msra.mxu0 0.0
    %131 = vmatprep.subr.mxu0 0.0
    %132 = vmatpush1.msra.mxu0 0.0
    %133 = vmatprep.subr.mxu0 0.0
    %134 = vmatpush1.msra.mxu0 0.0
    %135 = vmatprep.subr.mxu0 0.0
    %136 = vmatpush1.msra.mxu0 0.0
    %137 = vmatprep.subr.mxu0 0.0
    %138 = vmatpush1.msra.mxu0 0.0
    %139 = vmatprep.subr.mxu0 0.0
    %140 = vmatpush1.msra.mxu0 0.0
    %141 = vmatprep.subr.mxu0 0.0
    %142 = vmatpush1.msra.mxu0 0.0
    %143 = vmatprep.subr.mxu0 0.0
    %144 = vmatpush1.msra.mxu0 0.0
    %145 = vmatprep.subr.mxu0 0.0
    %146 = vmatpush1.msra.mxu0 0.0
    %147 = vmatprep.subr.mxu0 0.0
    %148 = vmatpush1.msra.mxu0 0.0
    %149 = vmatprep.subr.mxu0 0.0
    %150 = vmatpush1.msra.mxu0 0.0
    %151 = vmatprep.subr.mxu0 0.0
    %152 = vmatpush1.msra.mxu0 0.0
    %153 = vmatprep.subr.mxu0 0.0
    %154 = vmatpush1.msra.mxu0 0.0
    %155 = vmatprep.subr.mxu0 0.0
    %156 = vmatpush1.msra.mxu0 0.0
    %157 = vmatprep.subr.mxu0 0.0
    %158 = vmatpush1.msra.mxu0 0.0
    %159 = vmatprep.subr.mxu0 0.0
    %160 = vmatpush1.msra.mxu0 0.0
    %161 = vmatprep.subr.mxu0 0.0
    %162 = vmatpush1.msra.mxu0 0.0
    %163 = vmatprep.mubr.f32.mxu0 0.0
    %164 = vmatmul.mubr.f32.gmra.mrb[0].mxu0 %v97
    %v165 = vpop.f32.mrb[0].mxu0
    %v166 = vadd.f32 0.0, %v165
    %v167 = vpop.f32.mrb[0].mxu0
    %168 = vdwg.mxu0
    %v169 = vld [vmem:[%s2] sm:$0xff]
    %v170 = vld [vmem:[%s2 + $0x8] sm:$0xff]
    %v171 = vld [vmem:[%s2 + $0x10] sm:$0xff]
    %v172 = vld [vmem:[%s2 + $0x18] sm:$0xff]
    %vm173 = vcmask 261120
    %v175 = vsel %vm173, %v93, 0
    %v178 = vsel %vm173, %v166, 0
    %180 = vmatprep.subr.mxu0 0.0
    %181 = vmatpush1.msra.mxu0 %v169
    %182 = vmatprep.subr.mxu0 0.0
    %183 = vmatpush1.msra.mxu0 %v170
    %184 = vmatprep.subr.mxu0 0.0
    %185 = vmatpush1.msra.mxu0 %v171
    %186 = vmatprep.subr.mxu0 0.0
    %187 = vmatpush1.msra.mxu0 %v172
    %188 = vmatprep.subr.mxu0 0.0
    %189 = vmatpush1.msra.mxu0 0.0
    %190 = vmatprep.subr.mxu0 0.0
    %191 = vmatpush1.msra.mxu0 0.0
    %192 = vmatprep.subr.mxu0 0.0
    %193 = vmatpush1.msra.mxu0 0.0
    %194 = vmatprep.subr.mxu0 0.0
    %195 = vmatpush1.msra.mxu0 0.0
    %196 = vmatprep.subr.mxu0 0.0
    %197 = vmatpush1.msra.mxu0 0.0
    %198 = vmatprep.subr.mxu0 0.0
    %199 = vmatpush1.msra.mxu0 0.0
    %200 = vmatprep.subr.mxu0 0.0
    %201 = vmatpush1.msra.mxu0 0.0
    %202 = vmatprep.subr.mxu0 0.0
    %203 = vmatpush1.msra.mxu0 0.0
    %204 = vmatprep.subr.mxu0 0.0
    %205 = vmatpush1.msra.mxu0 0.0
    %206 = vmatprep.subr.mxu0 0.0
    %207 = vmatpush1.msra.mxu0 0.0
    %208 = vmatprep.subr.mxu0 0.0
    %209 = vmatpush1.msra.mxu0 0.0
    %210 = vmatprep.subr.mxu0 0.0
    %211 = vmatpush1.msra.mxu0 0.0
    %212 = vmatprep.subr.mxu0 0.0
    %213 = vmatpush1.msra.mxu0 0.0
    %214 = vmatprep.subr.mxu0 0.0
    %215 = vmatpush1.msra.mxu0 0.0
    %216 = vmatprep.subr.mxu0 0.0
    %217 = vmatpush1.msra.mxu0 0.0
    %218 = vmatprep.subr.mxu0 0.0
    %219 = vmatpush1.msra.mxu0 0.0
    %220 = vmatprep.subr.mxu0 0.0
    %221 = vmatpush1.msra.mxu0 0.0
    %222 = vmatprep.subr.mxu0 0.0
    %223 = vmatpush1.msra.mxu0 0.0
    %224 = vmatprep.subr.mxu0 0.0
    %225 = vmatpush1.msra.mxu0 0.0
    %226 = vmatprep.subr.mxu0 0.0
    %227 = vmatpush1.msra.mxu0 0.0
    %228 = vmatprep.subr.mxu0 0.0
    %229 = vmatpush1.msra.mxu0 0.0
    %230 = vmatprep.subr.mxu0 0.0
    %231 = vmatpush1.msra.mxu0 0.0
    %232 = vmatprep.subr.mxu0 0.0
    %233 = vmatpush1.msra.mxu0 0.0
    %234 = vmatprep.subr.mxu0 0.0
    %235 = vmatpush1.msra.mxu0 0.0
    %236 = vmatprep.subr.mxu0 0.0
    %237 = vmatpush1.msra.mxu0 0.0
    %238 = vmatprep.subr.mxu0 0.0
    %239 = vmatpush1.msra.mxu0 0.0
    %240 = vmatprep.subr.mxu0 0.0
    %241 = vmatpush1.msra.mxu0 0.0
    %242 = vmatprep.subr.mxu0 0.0
    %243 = vmatpush1.msra.mxu0 0.0
    %244 = vmatprep.mubr.f32.mxu0 0.0
    %245 = vmatmul.mubr.f32.gmra.mrb[0].mxu0 %v175
    %v246 = vpop.f32.mrb[0].mxu0
    %v247 = vadd.f32 0.0, %v246
    %v248 = vpop.f32.mrb[0].mxu0
    %249 = vmatprep.mubr.f32.mxu0 0.0
    %250 = vmatmul.mubr.f32.gmra.mrb[0].mxu0 %v178
    %v251 = vpop.f32.mrb[0].mxu0
    %v252 = vadd.f32 0.0, %v251
    %v253 = vpop.f32.mrb[0].mxu0
    %254 = vdwg.mxu0
    %v255 = vsel %vm22, %v18, 0.0
    %256 = vadd.xlane.f32.xlu0 %v255
    %v257 = vpop.xlane.xlu0 %256
    %v258 = vsel %vm22, %v19, 0.0
    %259 = vadd.xlane.f32.xlu0 %v258
    %v260 = vpop.xlane.xlu0 %259
    %v261 = vadd.f32 %v257, 1.0
    %v262 = vadd.f32 %v260, 1.0
    %v263 = vrcp.pop %v261
    %v264 = vrcp.pop %v262
    %v265 = vmul.f32 %v247, %v263
    %v266 = vmul.f32 %v252, %v264
    %v267 = vld [vmem:[%s3] sm:$0x1]
    %v269 = vlaneseq
    %v270 = vshrl.u32 %v269, 7
    %v271 = vsub.s32 0, %v270
    %v272 = vrot.slane %v267, %v271
    %v274 = vadd.f32 %v265, %v272
    %v275 = vadd.f32 %v266, %v272
    %v276 = vmax.f32 %v274, 0.0
    %v277 = vmax.f32 %v275, 0.0
    %278 = vst [vmem:[#allocation2] sm:$0xff] %v276
    %279 = vst [vmem:[#allocation2 + $0x8] sm:$0xff] %v277
    // Predicated region
    $region18: #{graph_convolution.1} parent=1 // pred_check
      _
    $region19: #{graph_convolution.1} parent=1 // pred_check_branch
      %281 = sbr.rel (0) target = $region21
    $region20: #{graph_convolution.1} parent=1 // pred_region
      %s283 = ssub.s32 256, 256
      %284 = vsyncadd [#allocation3], %s283
      %s285 = sshll.u32 [#allocation2], 4
      %s286 = int_to_ptr.vmem [resolvable:$true] %s285
      %291 = dma.vmem_to_hbm [thread:$0]  %s286, 256, %s4, [#allocation3], 128, 128, 8
    $region21: #{graph_convolution.1} parent=1 // pred_fallthru
      _
    // Predicated region
    $region22: #{graph_convolution.1} parent=1 // pred_check
      _
    $region23: #{graph_convolution.1} parent=1 // pred_check_branch
      %293 = sbr.rel (0) target = $region25
    $region24: #{graph_convolution.1} parent=1 // pred_region
      %294 = dma.done [#allocation3], 256
    $region25: #{graph_convolution.1} parent=1 // pred_fallthru
      _
    %295 = vsyncpa [#allocation3], 1

</llo_original>
